<compile_context>
chip_gen: v5e
topology: v5e:2x2
jax: 0.10.0
libtpu: 0.0.40
codegen_flags: <defaults>
</compile_context>

<pallas_src>
import functools

import jax
import jax.numpy as jnp
from jax.experimental import pallas as pl
from jax.experimental.pallas import tpu as pltpu

IN_FEATURES = 20
NUM_UNITS = 10      # dense0 output width
HIDDEN1 = 10        # dense1 output width
OUT_FEATURES = 1

_DEFAULT_TB = 2048  # batch tile (rows per grid step)


def _round_up(n, m):
    return ((n + m - 1) // m) * m


def _mlp_kernel(x_ref, w0_ref, b0_ref, w1_ref, b1_ref, w2_ref, b2_ref, o_ref):
    """relu(x@W0+b0) -> relu(.@W1+b1) -> final layer, emitted lane-dense as (1, TB)."""
    x = x_ref[...]                                                        # (TB, 20)

    h0 = jnp.dot(x, w0_ref[...], preferred_element_type=jnp.float32)      # (TB, 10)
    h0 = jnp.maximum(h0 + b0_ref[...], 0.0)                               # nonlin = relu

    h1 = jnp.dot(h0, w1_ref[...], preferred_element_type=jnp.float32)     # (TB, 10)
    h1 = jnp.maximum(h1 + b1_ref[...], 0.0)                               # F.relu

    # Final layer as an NT matmul: (1,10) x (TB,10)^T -> (1, TB). The result lands with
    # the batch on lanes, so the store is an unmasked, lane-dense vst.
    out = jnp.einsum("oh,bh->ob", w2_ref[...], h1,
                     preferred_element_type=jnp.float32)                  # (1, TB)
    o_ref[...] = (out + b2_ref[...]).astype(o_ref.dtype)


@functools.partial(jax.jit, static_argnames=("tb",))
def regressor_forward(x, w0, b0, w1, b1, w2, b2, *, tb=_DEFAULT_TB):
    """x: (B, 20) f32. w0:(20,10) w1:(10,10) (in,out); w2:(1,10) (out,in); biases (1,out)."""
    B = x.shape[0]
    # Tile sizing: single tile rounded to 8 sublanes for small batches; otherwise a
    # multiple of 128 so every block satisfies the (8, 128) constraint.
    if B <= tb:
        tb = _round_up(max(B, 1), 8)
    else:
        tb = _round_up(tb, 128)
    n_tiles = pl.cdiv(B, tb)
    b_pad = n_tiles * tb
    if b_pad != B:
        x = jnp.pad(x, ((0, b_pad - B), (0, 0)))  # zero rows: relu-safe, sliced off below

    # Weights/biases: full-array blocks, constant index_map -> resident in VMEM across grid.
    full = lambda a: pl.BlockSpec(a.shape, lambda i: (0,) * a.ndim,
                                  memory_space=pltpu.VMEM)

    flops_per_row = 2 * (IN_FEATURES * NUM_UNITS + NUM_UNITS * HIDDEN1
                         + HIDDEN1 * OUT_FEATURES)
    param_bytes = 4 * (IN_FEATURES * NUM_UNITS + NUM_UNITS
                       + NUM_UNITS * HIDDEN1 + HIDDEN1
                       + HIDDEN1 * OUT_FEATURES + OUT_FEATURES)

    out = pl.pallas_call(
        _mlp_kernel,
        out_shape=jax.ShapeDtypeStruct((1, b_pad), jnp.float32),
        grid=(n_tiles,),
        in_specs=[
            pl.BlockSpec((tb, IN_FEATURES), lambda i: (i, 0), memory_space=pltpu.VMEM),
            full(w0), full(b0), full(w1), full(b1), full(w2), full(b2),
        ],
        out_specs=pl.BlockSpec((1, tb), lambda i: (0, i), memory_space=pltpu.VMEM),
        compiler_params=pltpu.CompilerParams(
            dimension_semantics=("parallel",),   # megacore split on v7x; no-op v5e/v6e
        ),
        cost_estimate=pl.CostEstimate(
            flops=flops_per_row * b_pad,
            transcendentals=0,
            bytes_accessed=(IN_FEATURES + OUT_FEATURES) * 4 * b_pad + param_bytes,
        ),
    )(x, w0, b0, w1, b1, w2, b2)

    # (1, b_pad) lane-dense rows -> (B, 1) column expected by callers (free in XLA).
    return out.reshape(b_pad, OUT_FEATURES)[:B]


def init_params(key):
    """Deterministic init mimicking PyTorch nn.Linear default
    (uniform(-1/sqrt(fan_in), 1/sqrt(fan_in)))."""
    def linear(key, fan_in, fan_out, out_major):
        kw, kb = jax.random.split(key)
        bound = 1.0 / jnp.sqrt(float(fan_in))
        w_shape = (fan_out, fan_in) if out_major else (fan_in, fan_out)
        w = jax.random.uniform(kw, w_shape, jnp.float32, -bound, bound)
        b = jax.random.uniform(kb, (1, fan_out), jnp.float32, -bound, bound)
        return w, b

    k0, k1, k2 = jax.random.split(key, 3)
    w0, b0 = linear(k0, IN_FEATURES, NUM_UNITS, out_major=False)   # dense0: 20 -> 10
    w1, b1 = linear(k1, NUM_UNITS, HIDDEN1, out_major=False)       # dense1: 10 -> 10
    w2, b2 = linear(k2, HIDDEN1, OUT_FEATURES, out_major=True)     # output: 10 -> 1, (1,10)
    return w0, b0, w1, b1, w2, b2


if __name__ == "__main__":
    key = jax.random.PRNGKey(0)
    kx, kp = jax.random.split(key)
    params = init_params(kp)
    w0, b0, w1, b1, w2, b2 = params

    def ref_fn(xv):  # plain-JAX reference, same math as the PyTorch forward
        h = jnp.maximum(xv @ w0 + b0, 0.0)
        h = jnp.maximum(h @ w1 + b1, 0.0)
        return h @ w2.T + b2

    # Small single-tile case.
    B = 8
    x = jax.random.normal(kx, (B, IN_FEATURES), dtype=jnp.float32)
    out = regressor_forward(x, *params)
    jax.block_until_ready(out)
    assert out.shape == (B, OUT_FEATURES), out.shape
    assert jnp.allclose(out, ref_fn(x), atol=1e-5, rtol=1e-5)

    # Multi-tile + ragged batch case (exercises pipelining, padding, lane-dense store).
    B2 = 300
    x2 = jax.random.normal(jax.random.PRNGKey(1), (B2, IN_FEATURES), dtype=jnp.float32)
    out2 = regressor_forward(x2, *params, tb=128)
    jax.block_until_ready(out2)
    assert out2.shape == (B2, OUT_FEATURES), out2.shape
    assert jnp.allclose(out2, ref_fn(x2), atol=1e-5, rtol=1e-5)

    print("KERNEL_OK")
</pallas_src>

<mosaic_0001>
module attributes {stable_mosaic.version = 11 : i64} {
  func.func @_mlp_kernel(%arg0: i32, %arg1: memref<8x20xf32, #tpu.memory_space<vmem>>, %arg2: memref<20x10xf32, #tpu.memory_space<vmem>>, %arg3: memref<1x10xf32, #tpu.memory_space<vmem>>, %arg4: memref<10x10xf32, #tpu.memory_space<vmem>>, %arg5: memref<1x10xf32, #tpu.memory_space<vmem>>, %arg6: memref<1x10xf32, #tpu.memory_space<vmem>>, %arg7: memref<1x1xf32, #tpu.memory_space<vmem>>, %arg8: memref<1x8xf32, #tpu.memory_space<vmem>>) attributes {dimension_semantics = [#tpu.dimension_semantics<parallel>], iteration_bounds = array<i64: 1>, scalar_prefetch = 0 : i64, scratch_operands = 0 : i64, tpu.core_type = #tpu.core_type<tc>, window_params = [{transform_indices = @transform_0, window_bounds = array<i64: 8, 20>}, {pipeline_mode = #tpu.pipeline_mode<synchronous>, transform_indices = @transform_1, window_bounds = array<i64: 20, 10>}, {pipeline_mode = #tpu.pipeline_mode<synchronous>, transform_indices = @transform_2, window_bounds = array<i64: 1, 10>}, {pipeline_mode = #tpu.pipeline_mode<synchronous>, transform_indices = @transform_3, window_bounds = array<i64: 10, 10>}, {pipeline_mode = #tpu.pipeline_mode<synchronous>, transform_indices = @transform_4, window_bounds = array<i64: 1, 10>}, {pipeline_mode = #tpu.pipeline_mode<synchronous>, transform_indices = @transform_5, window_bounds = array<i64: 1, 10>}, {pipeline_mode = #tpu.pipeline_mode<synchronous>, transform_indices = @transform_6, window_bounds = array<i64: 1, 1>}, {transform_indices = @transform_7, window_bounds = array<i64: 1, 8>}]} {
    %c0 = arith.constant 0 : index
    %c0_0 = arith.constant 0 : index
    %0 = vector.load %arg1[%c0, %c0_0] : memref<8x20xf32, #tpu.memory_space<vmem>>, vector<8x20xf32>
    %c0_1 = arith.constant 0 : index
    %c0_2 = arith.constant 0 : index
    %1 = vector.load %arg2[%c0_1, %c0_2] : memref<20x10xf32, #tpu.memory_space<vmem>>, vector<20x10xf32>
    %cst = arith.constant dense<0.000000e+00> : vector<8x10xf32>
    %2 = tpu.matmul %0, %1, %cst {dimension_numbers = #tpu.dot_dimension_numbers<[1], [0], [0], [1], [0, 0, 1, 1], [], []>} : vector<8x20xf32>, vector<20x10xf32>, vector<8x10xf32> -> vector<8x10xf32>
    %c0_3 = arith.constant 0 : index
    %c0_4 = arith.constant 0 : index
    %3 = vector.load %arg3[%c0_3, %c0_4] : memref<1x10xf32, #tpu.memory_space<vmem>>, vector<1x10xf32>
    %4 = vector.broadcast %3 : vector<1x10xf32> to vector<8x10xf32>
    %5 = arith.addf %2, %4 : vector<8x10xf32>
    %cst_5 = arith.constant 0.000000e+00 : f32
    %6 = vector.broadcast %cst_5 : f32 to vector<8x10xf32>
    %7 = arith.maximumf %5, %6 : vector<8x10xf32>
    %c0_6 = arith.constant 0 : index
    %c0_7 = arith.constant 0 : index
    %8 = vector.load %arg4[%c0_6, %c0_7] : memref<10x10xf32, #tpu.memory_space<vmem>>, vector<10x10xf32>
    %cst_8 = arith.constant dense<0.000000e+00> : vector<8x10xf32>
    %9 = tpu.matmul %7, %8, %cst_8 {dimension_numbers = #tpu.dot_dimension_numbers<[1], [0], [0], [1], [0, 0, 1, 1], [], []>} : vector<8x10xf32>, vector<10x10xf32>, vector<8x10xf32> -> vector<8x10xf32>
    %c0_9 = arith.constant 0 : index
    %c0_10 = arith.constant 0 : index
    %10 = vector.load %arg5[%c0_9, %c0_10] : memref<1x10xf32, #tpu.memory_space<vmem>>, vector<1x10xf32>
    %11 = vector.broadcast %10 : vector<1x10xf32> to vector<8x10xf32>
    %12 = arith.addf %9, %11 : vector<8x10xf32>
    %cst_11 = arith.constant 0.000000e+00 : f32
    %13 = vector.broadcast %cst_11 : f32 to vector<8x10xf32>
    %14 = arith.maximumf %12, %13 : vector<8x10xf32>
    %c0_12 = arith.constant 0 : index
    %c0_13 = arith.constant 0 : index
    %15 = vector.load %arg6[%c0_12, %c0_13] : memref<1x10xf32, #tpu.memory_space<vmem>>, vector<1x10xf32>
    "tpu.trace_start"() <{level = 10 : i32, message = "oh,bh->ob"}> : () -> ()
    %cst_14 = arith.constant dense<0.000000e+00> : vector<1x8xf32>
    %16 = tpu.matmul %15, %14, %cst_14 {dimension_numbers = #tpu.dot_dimension_numbers<[1], [1], [0], [0], [0, 0, 1, 0], [], []>} : vector<1x10xf32>, vector<8x10xf32>, vector<1x8xf32> -> vector<1x8xf32>
    "tpu.trace_stop"() : () -> ()
    %c0_15 = arith.constant 0 : index
    %c0_16 = arith.constant 0 : index
    %17 = vector.load %arg7[%c0_15, %c0_16] : memref<1x1xf32, #tpu.memory_space<vmem>>, vector<1x1xf32>
    %18 = vector.broadcast %17 : vector<1x1xf32> to vector<1x8xf32>
    %19 = arith.addf %16, %18 : vector<1x8xf32>
    %c0_17 = arith.constant 0 : index
    %c0_18 = arith.constant 0 : index
    %20 = vector.load %arg8[%c0_17, %c0_18] : memref<1x8xf32, #tpu.memory_space<vmem>>, vector<1x8xf32>
    tpu.vector_store %arg8[%c0_17, %c0_18], %19 {strides = array<i32>} : memref<1x8xf32, #tpu.memory_space<vmem>>, vector<1x8xf32>,
    return
  }
  func.func @transform_0(%arg0: i32) -> (i32, i32) {
    %c0_i32 = arith.constant 0 : i32
    %c0_i32_0 = arith.constant 0 : i32
    return %arg0, %c0_i32 : i32, i32
  }
  func.func @transform_1(%arg0: i32) -> (i32, i32) {
    %c0_i32 = arith.constant 0 : i32
    %c0_i32_0 = arith.constant 0 : i32
    %c0_i32_1 = arith.constant 0 : i32
    return %c0_i32, %c0_i32_0 : i32, i32
  }
  func.func @transform_2(%arg0: i32) -> (i32, i32) {
    %c0_i32 = arith.constant 0 : i32
    %c0_i32_0 = arith.constant 0 : i32
    %c0_i32_1 = arith.constant 0 : i32
    return %c0_i32, %c0_i32_0 : i32, i32
  }
  func.func @transform_3(%arg0: i32) -> (i32, i32) {
    %c0_i32 = arith.constant 0 : i32
    %c0_i32_0 = arith.constant 0 : i32
    %c0_i32_1 = arith.constant 0 : i32
    return %c0_i32, %c0_i32_0 : i32, i32
  }
  func.func @transform_4(%arg0: i32) -> (i32, i32) {
    %c0_i32 = arith.constant 0 : i32
    %c0_i32_0 = arith.constant 0 : i32
    %c0_i32_1 = arith.constant 0 : i32
    return %c0_i32, %c0_i32_0 : i32, i32
  }
  func.func @transform_5(%arg0: i32) -> (i32, i32) {
    %c0_i32 = arith.constant 0 : i32
    %c0_i32_0 = arith.constant 0 : i32
    %c0_i32_1 = arith.constant 0 : i32
    return %c0_i32, %c0_i32_0 : i32, i32
  }
  func.func @transform_6(%arg0: i32) -> (i32, i32) {
    %c0_i32 = arith.constant 0 : i32
    %c0_i32_0 = arith.constant 0 : i32
    %c0_i32_1 = arith.constant 0 : i32
    return %c0_i32, %c0_i32_0 : i32, i32
  }
  func.func @transform_7(%arg0: i32) -> (i32, i32) {
    %c0_i32 = arith.constant 0 : i32
    %c0_i32_0 = arith.constant 0 : i32
    return %c0_i32, %arg0 : i32, i32
  }
}

</mosaic_0001>

<llo_original>
// kernel: regressor_forward.1
$region0: #{regressor_forward.1}
  #allocation0 [shape = 'u32[]', space=smem, size = 0x4, offset = 0x4, fixed_abs, tag = 'smem constant byte address 0x4 - core index']
  #allocation1 [shape = 'u32[72,128]{1,0:T(1,128)}', space=vmem, size = 0x9000, scoped, tag = 'internal scratch']
  #allocation2 [shape = 'f32[1,1]{1,0:T(1,128)S(1)}', space=vmem, size = 0x200, scoped, tag = 'scoped memory for regressor_forward.1']
  %s0 = inlined_call_operand.vmem [shape: f32[8,20], index: 0, kind: input, shape index: {}]
  %s1 = inlined_call_operand.vmem [shape: f32[20,10], index: 1, kind: input, shape index: {}]
  %s2 = inlined_call_operand.vmem [shape: f32[1,10], index: 2, kind: input, shape index: {}]
  %s3 = inlined_call_operand.vmem [shape: f32[10,10], index: 3, kind: input, shape index: {}]
  %s4 = inlined_call_operand.vmem [shape: f32[1,10], index: 4, kind: input, shape index: {}]
  %s5 = inlined_call_operand.vmem [shape: f32[1,10], index: 5, kind: input, shape index: {}]
  %s6 = inlined_call_operand.<no memory space> [shape: f32[1,1], index: 6, kind: input, shape index: {}]
  %s7 = inlined_call_operand.hbm [shape: f32[1,8], index: 7, kind: output, shape index: {}]
  %s8 = sld [smem:[#allocation0]]
  $region38: #{regressor_forward.1} parent=0
    _
  %s10 = ssub.s32 1, %s8
  %s11 = scalar_select 0, %s10, %s8
  %v12 = vstv %s6
  %13 = vst [vmem:[#allocation2] sm:$0x1] %v12
  $region1: #{regressor_forward.1} parent=0
    #allocation3 [shape = 'u8[512]{0}', space=vmem, size = 0x400, scoped, tag = 'output window, operand 0, single buffered']
    #allocation4 [shape = 's32[1]{0}', space=sflag, size = 0x4, scoped, tag = 'scoped memory for regressor_forward.1']
    %14 = vsyncpa [#allocation4], 0
    // Predicated region
    $region2: #{regressor_forward.1} parent=1 // pred_check
      _
    $region3: #{regressor_forward.1} parent=1 // pred_check_branch
      %16 = sbr.rel (0) target = $region5
    $region4: #{regressor_forward.1} parent=1 // pred_region
      _
    $region5: #{regressor_forward.1} parent=1 // pred_fallthru
      _
    // Predicated region
    $region6: #{regressor_forward.1} parent=1 // pred_check
      _
    $region7: #{regressor_forward.1} parent=1 // pred_check_branch
      %18 = sbr.rel (0) target = $region9
    $region8: #{regressor_forward.1} parent=1 // pred_region
      _
    $region9: #{regressor_forward.1} parent=1 // pred_fallthru
      _
    // Predicated region
    $region10: #{regressor_forward.1} parent=1 // pred_check
      _
    $region11: #{regressor_forward.1} parent=1 // pred_check_branch
      %20 = sbr.rel (0) target = $region13
    $region12: #{regressor_forward.1} parent=1 // pred_region
      _
    $region13: #{regressor_forward.1} parent=1 // pred_fallthru
      _
    // Predicated region
    $region14: #{regressor_forward.1} parent=1 // pred_check
      _
    $region15: #{regressor_forward.1} parent=1 // pred_check_branch
      %22 = sbr.rel (0) target = $region17
    $region16: #{regressor_forward.1} parent=1 // pred_region
      _
    $region17: #{regressor_forward.1} parent=1 // pred_fallthru
      _
    // Predicated region
    $region18: #{regressor_forward.1} parent=1 // pred_check
      _
    $region19: #{regressor_forward.1} parent=1 // pred_check_branch
      %24 = sbr.rel (0) target = $region21
    $region20: #{regressor_forward.1} parent=1 // pred_region
      _
    $region21: #{regressor_forward.1} parent=1 // pred_fallthru
      _
    // Predicated region
    $region22: #{regressor_forward.1} parent=1 // pred_check
      _
    $region23: #{regressor_forward.1} parent=1 // pred_check_branch
      %26 = sbr.rel (0) target = $region25
    $region24: #{regressor_forward.1} parent=1 // pred_region
      _
    $region25: #{regressor_forward.1} parent=1 // pred_fallthru
      _
    // Predicated region
    $region26: #{regressor_forward.1} parent=1 // pred_check
      _
    $region27: #{regressor_forward.1} parent=1 // pred_check_branch
      %28 = sbr.rel (0) target = $region29
    $region28: #{regressor_forward.1} parent=1 // pred_region
      _
    $region29: #{regressor_forward.1} parent=1 // pred_fallthru
      _
    %v29 = vld [vmem:[%s0] sm:$0xff]
    %v30 = vld [vmem:[%s1] sm:$0xff]
    %v31 = vld [vmem:[%s1 + $0x8] sm:$0xff]
    %v32 = vld [vmem:[%s1 + $0x10] sm:$0xf]
    %v33 = vld [vmem:[%s2] sm:$0x1]
    %v35 = vperm.slane %v33, 0
    %vm37 = vcmask 162816
    %v39 = vsel %vm37, %v29, 0
    %vm41 = vcmask 1043456
    %v43 = vsel %vm41, %v32, 0
    %45 = vmatpush.msra.mxu0 0.0
    %46 = vmatpush.msra.mxu0 0.0
    %47 = vmatpush.msra.mxu0 0.0
    %48 = vmatpush.msra.mxu0 0.0
    %49 = vmatpush.msra.mxu0 0.0
    %50 = vmatpush.msra.mxu0 0.0
    %51 = vmatpush.msra.mxu0 0.0
    %52 = vmatpush.msra.mxu0 0.0
    %53 = vmatpush.msra.mxu0 0.0
    %54 = vmatpush.msra.mxu0 0.0
    %55 = vmatpush.msra.mxu0 0.0
    %56 = vmatpush.msra.mxu0 0.0
    %57 = vmatpush.msra.mxu0 0.0
    %58 = vmatpush.msra.mxu0 %v43
    %59 = vmatpush.msra.mxu0 %v31
    %60 = vmatpush.msra.mxu0 %v30
    %61 = vmatmul.f32.gmra.mxu0 %v39
    %v62 = vpop.f32.mrf.mxu0
    %v63 = vadd.f32 %v35, %v62
    %64 = vdwg.mxu0
    %v65 = vmax.f32 %v63, 0.0
    %v66 = vld [vmem:[%s3] sm:$0xff]
    %v67 = vld [vmem:[%s3 + $0x8] sm:$0x3]
    %v68 = vld [vmem:[%s4] sm:$0x1]
    %v70 = vperm.slane %v68, 0
    %vm72 = vcmask 80896
    %v74 = vsel %vm72, %v65, 0
    %vm76 = vcmask 1041408
    %v78 = vsel %vm76, %v67, 0
    %80 = vmatpush.msra.mxu0 0.0
    %81 = vmatpush.msra.mxu0 0.0
    %82 = vmatpush.msra.mxu0 0.0
    %83 = vmatpush.msra.mxu0 0.0
    %84 = vmatpush.msra.mxu0 0.0
    %85 = vmatpush.msra.mxu0 0.0
    %86 = vmatpush.msra.mxu0 0.0
    %87 = vmatpush.msra.mxu0 0.0
    %88 = vmatpush.msra.mxu0 0.0
    %89 = vmatpush.msra.mxu0 0.0
    %90 = vmatpush.msra.mxu0 0.0
    %91 = vmatpush.msra.mxu0 0.0
    %92 = vmatpush.msra.mxu0 0.0
    %93 = vmatpush.msra.mxu0 0.0
    %94 = vmatpush.msra.mxu0 %v78
    %95 = vmatpush.msra.mxu0 %v66
    %96 = vmatmul.f32.gmra.mxu0 %v74
    %v97 = vpop.f32.mrf.mxu0
    %v98 = vadd.f32 %v70, %v97
    %99 = vdwg.mxu0
    %v100 = vmax.f32 %v98, 0.0
    %v101 = vld [vmem:[%s5] sm:$0x1]
    %v102 = vld [vmem:[#allocation2] sm:$0x1]
    %104 = vset.pattern.permute.xlu0 0
    %105 = vperm.xlu0 %104, %v102
    %v106 = vpop.permute.xlu0 %105
    %v108 = vperm.slane %v106, 0
    %v110 = vsel %vm72, %v101, 0
    %v113 = vsel %vm72, %v100, 0
    %115 = vmatpush.xpose.msra.mxu0 0.0
    %116 = vmatpush.xpose.msra.mxu0 0.0
    %117 = vmatpush.xpose.msra.mxu0 0.0
    %118 = vmatpush.xpose.msra.mxu0 0.0
    %119 = vmatpush.xpose.msra.mxu0 0.0
    %120 = vmatpush.xpose.msra.mxu0 0.0
    %121 = vmatpush.xpose.msra.mxu0 0.0
    %122 = vmatpush.xpose.msra.mxu0 0.0
    %123 = vmatpush.xpose.msra.mxu0 0.0
    %124 = vmatpush.xpose.msra.mxu0 0.0
    %125 = vmatpush.xpose.msra.mxu0 0.0
    %126 = vmatpush.xpose.msra.mxu0 0.0
    %127 = vmatpush.xpose.msra.mxu0 0.0
    %128 = vmatpush.xpose.msra.mxu0 0.0
    %129 = vmatpush.xpose.msra.mxu0 0.0
    %130 = vmatpush.xpose.msra.mxu0 %v113
    %131 = vmatmul.f32.gmra.mxu0 %v110
    %v132 = vpop.f32.mrf.mxu0
    %v133 = vadd.f32 %v108, %v132
    %134 = vdwg.mxu0
    %vm135 = vcmask 57344
    %136 = vst.msk [vmem:[#allocation3] sm:$0x1] %vm135, %v133
    // Predicated region
    $region30: #{regressor_forward.1} parent=1 // pred_check
      _
    $region31: #{regressor_forward.1} parent=1 // pred_check_branch
      %138 = sbr.rel (0) target = $region33
    $region32: #{regressor_forward.1} parent=1 // pred_region
      %140 = vsyncadd [#allocation4], 0
      %s142 = sshll.u32 [#allocation3], 4
      %s143 = int_to_ptr.vmem [resolvable:$true] %s142
      %s144 = sshll.u32 %s7, 4
      %s145 = int_to_ptr.hbm [resolvable:$true] %s144
      %147 = dma.vmem_to_hbm [thread:$0]  %s143, 16, %s145, [#allocation4]
    $region33: #{regressor_forward.1} parent=1 // pred_fallthru
      _
    // Predicated region
    $region34: #{regressor_forward.1} parent=1 // pred_check
      _
    $region35: #{regressor_forward.1} parent=1 // pred_check_branch
      %149 = sbr.rel (0) target = $region37
    $region36: #{regressor_forward.1} parent=1 // pred_region
      %151 = dma.done [#allocation4], 16
    $region37: #{regressor_forward.1} parent=1 // pred_fallthru
      _
    %152 = vsyncpa [#allocation4], 1

</llo_original>
